<compile_context>
chip_gen: v6e
topology: v6e:2x2x1
jax: 0.10.0
libtpu: 0.0.40
codegen_flags: <defaults>
</compile_context>

<pallas_src>
import numpy as np
import jax
import jax.numpy as jnp
from jax.experimental import pallas as pl
from jax.experimental.pallas import tpu as pltpu

# ----------------------------- configuration -------------------------------
SR = 16000
N_FFT = 512
HOP = 160
WIN = 512
N_MELS = 36
PITCH_MIN = 70
PITCH_MAX = 400
YIN_THRESHOLD = 0.1

N_FREQ = N_FFT // 2 + 1                  # 257 one-sided mel bins
TAU_MIN = SR // PITCH_MAX                # 40
TAU_MAX = SR // PITCH_MIN                # 228
YIN_FRAME = 2 * TAU_MAX                  # 456 (prefix of the 512-sample mel frame)
NY = 1024                                # torchyin FFT size for the 456-sample frame
KY = NY // 2                             # 512 one-sided YIN bins (k = 1..512)

KBINS = 256                              # mel DFT bins on the MXU (k = 0..255)
MP = 128                                 # mel output lanes (36 -> 128)
TP = 256                                 # YIN lag lanes (228 -> 256)
MAX_TILE = 256                           # frames per grid step (raise to 512 on v6e
                                         # for long audio; keep 256 on v7x)

MATMUL_DTYPE = jnp.bfloat16              # set to jnp.float32 if tolerance tests
                                         # vs torchaudio / torchyin fail

# fused forward-DFT matrix column layout
MEL_RE0 = 0                              # hann*cos, k = 0..255
MEL_IM0 = KBINS                          # hann*sin, k = 0..255 (lane 0 = Nyquist re)
YIN_RE0 = 2 * KBINS                      # cos 1024-pt DFT, k = 1..512 (rows>=456 zero)
YIN_IM0 = YIN_RE0 + KY                   # sin 1024-pt DFT, k = 1..512
YIN_DC0 = YIN_IM0 + KY                   # ones column -> sum over the YIN frame
FWD_COLS = ((YIN_DC0 + 1 + 127) // 128) * 128       # 1664, lane-dense padding


def _round_up(x, m):
    return ((x + m - 1) // m) * m


# ----------------------------- parameter setup -----------------------------
def _hann_periodic(n):
    k = np.arange(n)
    return 0.5 - 0.5 * np.cos(2.0 * np.pi * k / n)


def _mel_filterbank():
    """torchaudio melscale_fbanks(257, 0, sr/2, 36, sr, norm=None, 'htk'),
    split into the k<256 block (256, 128) and the Nyquist row (1, 128)."""
    def hz_to_mel(f):
        return 2595.0 * np.log10(1.0 + f / 700.0)

    def mel_to_hz(m):
        return 700.0 * (10.0 ** (m / 2595.0) - 1.0)

    all_freqs = np.linspace(0.0, SR / 2.0, N_FREQ)
    m_pts = np.linspace(hz_to_mel(0.0), hz_to_mel(SR / 2.0), N_MELS + 2)
    f_pts = mel_to_hz(m_pts)
    f_diff = np.diff(f_pts)
    slopes = f_pts[None, :] - all_freqs[:, None]            # (257, 38)
    down = -slopes[:, :-2] / f_diff[:-1]
    up = slopes[:, 2:] / f_diff[1:]
    fb = np.maximum(0.0, np.minimum(down, up))               # (257, 36)
    fb = np.pad(fb, ((0, 0), (0, MP - N_MELS)))               # (257, 128)
    return fb[:KBINS], fb[KBINS:KBINS + 1]                    # (256,128), (1,128)


def _build_constants_np():
    n = np.arange(N_FFT)

    # mel: Hann-windowed real DFT, k = 0..255; the all-zero sin(k=0) column is
    # replaced by hann * (-1)^n so the Nyquist-bin real part rides the matmul.
    k_mel = np.arange(KBINS)
    ang_mel = 2.0 * np.pi * (np.outer(n, k_mel) % N_FFT) / N_FFT
    w = _hann_periodic(N_FFT)
    mel_cos = w[:, None] * np.cos(ang_mel)
    mel_sin = w[:, None] * np.sin(ang_mel)
    mel_sin[:, 0] = w * ((-1.0) ** n)

    # YIN: one-sided 1024-point DFT of the (implicitly zero-extended) 456-sample
    # YIN frame.  Zeroing rows j >= 456 folds the frame-length mask into the
    # constants, so the kernel can feed the raw 512-sample mel frame directly.
    k_yin = np.arange(1, KY + 1)
    ang_yin = 2.0 * np.pi * (np.outer(n, k_yin) % NY) / NY
    ymask = (n < YIN_FRAME).astype(np.float64)
    yin_cos = ymask[:, None] * np.cos(ang_yin)
    yin_sin = ymask[:, None] * np.sin(ang_yin)
    yin_dc = ymask[:, None]                                   # DC bin (frame sum)

    fwd = np.concatenate([mel_cos, mel_sin, yin_cos, yin_sin, yin_dc], axis=1)
    fwd = np.pad(fwd, ((0, 0), (0, FWD_COLS - fwd.shape[1])))  # (512, 1664)

    imask = np.ones((1, KBINS))
    imask[0, 0] = 0.0            # lane 0 of the mel-imag block carries the Nyquist value

    fb, fbnyq = _mel_filterbank()

    # inverse cosine DFT: |X_k|^2 (k=1..512) -> autocorrelation at lags 0..255;
    # conjugate-symmetry weights (2 for k<512, 1 for k=512) and 1/N folded in.
    t = np.arange(TP)
    ang_inv = 2.0 * np.pi * (np.outer(k_yin, t) % NY) / NY
    wk = np.where(k_yin == KY, 1.0, 2.0)[:, None]
    yinv = wk * np.cos(ang_inv) / NY                          # (512, 256)

    # energy mask (torchyin eq. 6): full-frame energy + 229-sample shifted-window
    # energy, with the j >= 456 frame guard folded in.
    j = np.arange(N_FFT)[:, None]
    tt = np.arange(TP)[None, :]
    emask = (j < YIN_FRAME) * (1.0 + ((j >= tt) & (j <= tt + TAU_MAX)))
    emask = emask.astype(np.float64)                          # (512, 256)

    return fwd, imask, fb, fbnyq, yinv, emask


_FWD_NP, _IMASK_NP, _FB_NP, _FBNYQ_NP, _YINV_NP, _EMASK_NP = _build_constants_np()


# ------------------------------- kernel -------------------------------------
def logmel_yin_kernel(frames_ref, fwd_ref, imask_ref, fb_ref, fbnyq_ref,
                      yinv_ref, emask_ref, mel_ref, yin_ref):
    x = frames_ref[...]                                       # (TF, 512) f32
    xb = x.astype(MATMUL_DTYPE)

    # One MXU pass over the frame tile: mel DFT + Nyquist + YIN DFT + YIN DC.
    spec = jnp.dot(xb, fwd_ref[...], preferred_element_type=jnp.float32)

    # ------------------------------ mel -----------------------------------
    re = spec[:, MEL_RE0:MEL_RE0 + KBINS]
    im_raw = spec[:, MEL_IM0:MEL_IM0 + KBINS]
    re_nyq = im_raw[:, 0:1]                                   # Nyquist-bin real part
    im = im_raw * imask_ref[...]                              # zero the stashed lane
    mag = jnp.sqrt(re * re + im * im)                         # power=1 spectrogram
    mel = jnp.dot(mag.astype(MATMUL_DTYPE), fb_ref[...],
                  preferred_element_type=jnp.float32)
    mel = mel + jnp.abs(re_nyq) * fbnyq_ref[...]
    mel_ref[...] = jnp.log(mel + 1e-8)

    # -------------------- YIN difference (torchyin eq. 6) ------------------
    yr = spec[:, YIN_RE0:YIN_RE0 + KY]
    yi = spec[:, YIN_IM0:YIN_IM0 + KY]
    s0 = spec[:, YIN_DC0:YIN_DC0 + 1]
    power = yr * yr + yi * yi                                 # |X_k|^2, k = 1..512
    corr = jnp.dot(power.astype(MATMUL_DTYPE), yinv_ref[...],
                   preferred_element_type=jnp.float32)        # autocorr lags 0..255
    corr = corr + (s0 * s0) * (1.0 / NY)                      # DC term
    xsq = (x * x).astype(MATMUL_DTYPE)
    energy = jnp.dot(xsq, emask_ref[...],
                     preferred_element_type=jnp.float32)      # e_full + e_shift(t)
    yin_ref[...] = energy - 2.0 * corr


# ------------------------------- wrapper -------------------------------------
def _const_spec(shape):
    # Constant operand: same block every grid step -> stays VMEM-resident.
    # TODO(synk): pipeline_mode=pl.Buffered(1) would drop the redundant second
    # buffer (~2 MiB total); skipped since the footprint is already tiny.
    return pl.BlockSpec(shape, lambda i: (0,) * len(shape))


def _pick_tile(f):
    # Largest power-of-two tile (capped at MAX_TILE) that keeps >= 2 grid steps,
    # so the "parallel" frame axis can be sharded across v7x's two TensorCores.
    tile = MAX_TILE
    while tile > 8 and pl.cdiv(f, tile) < 2:
        tile //= 2
    return min(tile, _round_up(f, 8))


def logmel_yin_pallas(frames):
    f = frames.shape[0]
    tile = _pick_tile(f)
    fp = _round_up(f, tile)
    frames = jnp.pad(frames, ((0, fp - f), (0, 0)))

    md = MATMUL_DTYPE
    fwd = jnp.asarray(_FWD_NP, md)
    imask = jnp.asarray(_IMASK_NP, jnp.float32)
    fb = jnp.asarray(_FB_NP, md)
    fbnyq = jnp.asarray(_FBNYQ_NP, jnp.float32)
    yinv = jnp.asarray(_YINV_NP, md)
    emask = jnp.asarray(_EMASK_NP, md)

    mel, yin = pl.pallas_call(
        logmel_yin_kernel,
        out_shape=(jax.ShapeDtypeStruct((fp, MP), jnp.float32),
                   jax.ShapeDtypeStruct((fp, TP), jnp.float32)),
        grid=(fp // tile,),
        in_specs=[
            pl.BlockSpec((tile, N_FFT), lambda i: (i, 0)),
            _const_spec(fwd.shape),
            _const_spec(imask.shape),
            _const_spec(fb.shape),
            _const_spec(fbnyq.shape),
            _const_spec(yinv.shape),
            _const_spec(emask.shape),
        ],
        out_specs=(pl.BlockSpec((tile, MP), lambda i: (i, 0)),
                   pl.BlockSpec((tile, TP), lambda i: (i, 0))),
        compiler_params=pltpu.CompilerParams(dimension_semantics=("parallel",)),
    )(frames, fwd, imask, fb, fbnyq, yinv, emask)
    return mel[:f], yin[:f]


# ------------------------------- forward ------------------------------------
def log_mel_forward(y):
    """y: (1, T) float32  ->  (N_MELS + 1, num_frames) float32."""
    padding = (N_FFT - HOP) // 2                              # 176
    ypad = jnp.pad(y, ((0, 0), (padding, padding)), mode="reflect")[0]   # squeeze(0)
    tp_len = ypad.shape[0]
    n_frames = 1 + (tp_len - N_FFT) // HOP

    # Single frame gather shared by both features: the YIN frame is exactly
    # frames[:, :456].  (torchyin may produce up to one extra trailing frame;
    # both features are cropped to the mel frame count so the concat is valid.)
    # TODO(synk): for very long audio replace this XLA gather with a manual-DMA
    # framing kernel (waveform in memory_space=pl.ANY) to avoid HBM duplication.
    idx = jnp.arange(n_frames)[:, None] * HOP + jnp.arange(N_FFT)[None, :]
    frames = ypad[idx]                                        # (n_frames, 512)

    logmel_p, d_full = logmel_yin_pallas(frames)
    logmel = logmel_p[:, :N_MELS].T                           # (36, n_frames)
    d = d_full[:, :TAU_MAX]                                   # lags 0..227

    # Cumulative-mean-normalized difference + threshold search (XLA glue).
    # Mirrors torchyin._search exactly, including its "argmax index 0 means
    # unvoiced" sentinel — kept deliberately for spec fidelity.
    d1 = d[:, 1:]
    taus = jnp.arange(1, TAU_MAX, dtype=jnp.float32)
    cmnd = d1 * taus / jnp.maximum(jnp.cumsum(d1, axis=-1), 1e-5)
    cmdf = cmnd[:, TAU_MIN:]
    first_below = jnp.argmax(cmdf < YIN_THRESHOLD, axis=-1)
    first_below = jnp.where(first_below > 0, first_below, TAU_MAX)
    beyond = jnp.arange(cmdf.shape[-1])[None, :] >= first_below[:, None]
    increasing = jnp.pad(jnp.diff(cmdf, axis=-1) >= 0.0, ((0, 0), (0, 1)),
                         constant_values=True)
    tau_idx = jnp.argmax(beyond & increasing, axis=-1)
    pitch = jnp.where(tau_idx > 0,
                      SR / (tau_idx + TAU_MIN + 1).astype(jnp.float32),
                      jnp.float32(0.0))                       # (n_frames,)

    return jnp.concatenate([logmel, pitch[None, :]], axis=0)  # (N_MELS+1, frames)


# --------------------------------- main --------------------------------------
if __name__ == "__main__":
    key = jax.random.PRNGKey(0)
    T = 1600                                                  # 0.1 s of audio
    y = jax.random.normal(key, (1, T), dtype=jnp.float32)

    out = jax.jit(log_mel_forward)(y)
    out = jax.block_until_ready(out)

    expected_frames = 1 + (T + 2 * ((N_FFT - HOP) // 2) - N_FFT) // HOP
    assert out.shape == (N_MELS + 1, expected_frames), out.shape
    assert out.dtype == jnp.float32
    assert bool(jnp.all(jnp.isfinite(out)))
    print("KERNEL_OK")
</pallas_src>

<mosaic_0001>
module attributes {stable_mosaic.version = 11 : i64} {
  func.func @logmel_yin_kernel(%arg0: i32, %arg1: memref<8x512xf32, #tpu.memory_space<vmem>>, %arg2: memref<512x1664xbf16, #tpu.memory_space<vmem>>, %arg3: memref<1x256xf32, #tpu.memory_space<vmem>>, %arg4: memref<256x128xbf16, #tpu.memory_space<vmem>>, %arg5: memref<1x128xf32, #tpu.memory_space<vmem>>, %arg6: memref<512x256xbf16, #tpu.memory_space<vmem>>, %arg7: memref<512x256xbf16, #tpu.memory_space<vmem>>, %arg8: memref<8x128xf32, #tpu.memory_space<vmem>>, %arg9: memref<8x256xf32, #tpu.memory_space<vmem>>) attributes {dimension_semantics = [#tpu.dimension_semantics<parallel>], iteration_bounds = array<i64: 2>, scalar_prefetch = 0 : i64, scratch_operands = 0 : i64, tpu.core_type = #tpu.core_type<tc>, window_params = [{transform_indices = @transform_0, window_bounds = array<i64: 8, 512>}, {pipeline_mode = #tpu.pipeline_mode<synchronous>, transform_indices = @transform_1, window_bounds = array<i64: 512, 1664>}, {pipeline_mode = #tpu.pipeline_mode<synchronous>, transform_indices = @transform_2, window_bounds = array<i64: 1, 256>}, {pipeline_mode = #tpu.pipeline_mode<synchronous>, transform_indices = @transform_3, window_bounds = array<i64: 256, 128>}, {pipeline_mode = #tpu.pipeline_mode<synchronous>, transform_indices = @transform_4, window_bounds = array<i64: 1, 128>}, {pipeline_mode = #tpu.pipeline_mode<synchronous>, transform_indices = @transform_5, window_bounds = array<i64: 512, 256>}, {pipeline_mode = #tpu.pipeline_mode<synchronous>, transform_indices = @transform_6, window_bounds = array<i64: 512, 256>}, {transform_indices = @transform_7, window_bounds = array<i64: 8, 128>}, {transform_indices = @transform_8, window_bounds = array<i64: 8, 256>}]} {
    %c0 = arith.constant 0 : index
    %c0_0 = arith.constant 0 : index
    %0 = vector.load %arg1[%c0, %c0_0] : memref<8x512xf32, #tpu.memory_space<vmem>>, vector<8x512xf32>
    %1 = arith.truncf %0 : vector<8x512xf32> to vector<8x512xbf16>
    %c0_1 = arith.constant 0 : index
    %c0_2 = arith.constant 0 : index
    %2 = vector.load %arg2[%c0_1, %c0_2] : memref<512x1664xbf16, #tpu.memory_space<vmem>>, vector<512x1664xbf16>
    %cst = arith.constant dense<0.000000e+00> : vector<8x1664xf32>
    %3 = tpu.matmul %1, %2, %cst {dimension_numbers = #tpu.dot_dimension_numbers<[1], [0], [0], [1], [0, 0, 1, 1], [], []>} : vector<8x512xbf16>, vector<512x1664xbf16>, vector<8x1664xf32> -> vector<8x1664xf32>
    %4 = vector.extract_strided_slice %3 {offsets = [0, 0], sizes = [8, 256], strides = [1, 1]} : vector<8x1664xf32> to vector<8x256xf32>
    %5 = vector.extract_strided_slice %3 {offsets = [0, 256], sizes = [8, 256], strides = [1, 1]} : vector<8x1664xf32> to vector<8x256xf32>
    %6 = vector.extract_strided_slice %5 {offsets = [0, 0], sizes = [8, 1], strides = [1, 1]} : vector<8x256xf32> to vector<8x1xf32>
    %c0_3 = arith.constant 0 : index
    %c0_4 = arith.constant 0 : index
    %7 = vector.load %arg3[%c0_3, %c0_4] : memref<1x256xf32, #tpu.memory_space<vmem>>, vector<1x256xf32>
    %8 = vector.broadcast %7 : vector<1x256xf32> to vector<8x256xf32>
    %9 = arith.mulf %5, %8 : vector<8x256xf32>
    %10 = arith.mulf %4, %4 : vector<8x256xf32>
    %11 = arith.mulf %9, %9 : vector<8x256xf32>
    %12 = arith.addf %10, %11 : vector<8x256xf32>
    %13 = math.sqrt %12 : vector<8x256xf32>
    %14 = arith.truncf %13 : vector<8x256xf32> to vector<8x256xbf16>
    %c0_5 = arith.constant 0 : index
    %c0_6 = arith.constant 0 : index
    %15 = vector.load %arg4[%c0_5, %c0_6] : memref<256x128xbf16, #tpu.memory_space<vmem>>, vector<256x128xbf16>
    %cst_7 = arith.constant dense<0.000000e+00> : vector<8x128xf32>
    %16 = tpu.matmul %14, %15, %cst_7 {dimension_numbers = #tpu.dot_dimension_numbers<[1], [0], [0], [1], [0, 0, 1, 1], [], []>} : vector<8x256xbf16>, vector<256x128xbf16>, vector<8x128xf32> -> vector<8x128xf32>
    %17 = math.absf %6 : vector<8x1xf32>
    %c0_8 = arith.constant 0 : index
    %c0_9 = arith.constant 0 : index
    %18 = vector.load %arg5[%c0_8, %c0_9] : memref<1x128xf32, #tpu.memory_space<vmem>>, vector<1x128xf32>
    %19 = vector.broadcast %17 : vector<8x1xf32> to vector<8x128xf32>
    %20 = vector.broadcast %18 : vector<1x128xf32> to vector<8x128xf32>
    %21 = arith.mulf %19, %20 : vector<8x128xf32>
    %22 = arith.addf %16, %21 : vector<8x128xf32>
    %cst_10 = arith.constant 9.99999993E-9 : f32
    %23 = vector.broadcast %cst_10 : f32 to vector<8x128xf32>
    %24 = arith.addf %22, %23 : vector<8x128xf32>
    %25 = math.log %24 : vector<8x128xf32>
    %c0_11 = arith.constant 0 : index
    %c0_12 = arith.constant 0 : index
    %26 = vector.load %arg8[%c0_11, %c0_12] : memref<8x128xf32, #tpu.memory_space<vmem>>, vector<8x128xf32>
    tpu.vector_store %arg8[%c0_11, %c0_12], %25 {strides = array<i32>} : memref<8x128xf32, #tpu.memory_space<vmem>>, vector<8x128xf32>,
    %27 = vector.extract_strided_slice %3 {offsets = [0, 512], sizes = [8, 512], strides = [1, 1]} : vector<8x1664xf32> to vector<8x512xf32>
    %28 = vector.extract_strided_slice %3 {offsets = [0, 1024], sizes = [8, 512], strides = [1, 1]} : vector<8x1664xf32> to vector<8x512xf32>
    %29 = vector.extract_strided_slice %3 {offsets = [0, 1536], sizes = [8, 1], strides = [1, 1]} : vector<8x1664xf32> to vector<8x1xf32>
    %30 = arith.mulf %27, %27 : vector<8x512xf32>
    %31 = arith.mulf %28, %28 : vector<8x512xf32>
    %32 = arith.addf %30, %31 : vector<8x512xf32>
    %33 = arith.truncf %32 : vector<8x512xf32> to vector<8x512xbf16>
    %c0_13 = arith.constant 0 : index
    %c0_14 = arith.constant 0 : index
    %34 = vector.load %arg6[%c0_13, %c0_14] : memref<512x256xbf16, #tpu.memory_space<vmem>>, vector<512x256xbf16>
    %cst_15 = arith.constant dense<0.000000e+00> : vector<8x256xf32>
    %35 = tpu.matmul %33, %34, %cst_15 {dimension_numbers = #tpu.dot_dimension_numbers<[1], [0], [0], [1], [0, 0, 1, 1], [], []>} : vector<8x512xbf16>, vector<512x256xbf16>, vector<8x256xf32> -> vector<8x256xf32>
    %36 = arith.mulf %29, %29 : vector<8x1xf32>
    %cst_16 = arith.constant 9.765625E-4 : f32
    %37 = vector.broadcast %cst_16 : f32 to vector<8x1xf32>
    %38 = arith.mulf %36, %37 : vector<8x1xf32>
    %39 = vector.broadcast %38 : vector<8x1xf32> to vector<8x256xf32>
    %40 = arith.addf %35, %39 : vector<8x256xf32>
    %41 = arith.mulf %0, %0 : vector<8x512xf32>
    %42 = arith.truncf %41 : vector<8x512xf32> to vector<8x512xbf16>
    %c0_17 = arith.constant 0 : index
    %c0_18 = arith.constant 0 : index
    %43 = vector.load %arg7[%c0_17, %c0_18] : memref<512x256xbf16, #tpu.memory_space<vmem>>, vector<512x256xbf16>
    %cst_19 = arith.constant dense<0.000000e+00> : vector<8x256xf32>
    %44 = tpu.matmul %42, %43, %cst_19 {dimension_numbers = #tpu.dot_dimension_numbers<[1], [0], [0], [1], [0, 0, 1, 1], [], []>} : vector<8x512xbf16>, vector<512x256xbf16>, vector<8x256xf32> -> vector<8x256xf32>
    %cst_20 = arith.constant 2.000000e+00 : f32
    %45 = vector.broadcast %cst_20 : f32 to vector<8x256xf32>
    %46 = arith.mulf %45, %40 : vector<8x256xf32>
    %47 = arith.subf %44, %46 : vector<8x256xf32>
    %c0_21 = arith.constant 0 : index
    %c0_22 = arith.constant 0 : index
    %48 = vector.load %arg9[%c0_21, %c0_22] : memref<8x256xf32, #tpu.memory_space<vmem>>, vector<8x256xf32>
    tpu.vector_store %arg9[%c0_21, %c0_22], %47 {strides = array<i32>} : memref<8x256xf32, #tpu.memory_space<vmem>>, vector<8x256xf32>,
    return
  }
  func.func @transform_0(%arg0: i32) -> (i32, i32) {
    %c0_i32 = arith.constant 0 : i32
    %c0_i32_0 = arith.constant 0 : i32
    return %arg0, %c0_i32 : i32, i32
  }
  func.func @transform_1(%arg0: i32) -> (i32, i32) {
    %c0_i32 = arith.constant 0 : i32
    %c0_i32_0 = arith.constant 0 : i32
    %c0_i32_1 = arith.constant 0 : i32
    return %c0_i32, %c0_i32_0 : i32, i32
  }
  func.func @transform_2(%arg0: i32) -> (i32, i32) {
    %c0_i32 = arith.constant 0 : i32
    %c0_i32_0 = arith.constant 0 : i32
    %c0_i32_1 = arith.constant 0 : i32
    return %c0_i32, %c0_i32_0 : i32, i32
  }
  func.func @transform_3(%arg0: i32) -> (i32, i32) {
    %c0_i32 = arith.constant 0 : i32
    %c0_i32_0 = arith.constant 0 : i32
    %c0_i32_1 = arith.constant 0 : i32
    return %c0_i32, %c0_i32_0 : i32, i32
  }
  func.func @transform_4(%arg0: i32) -> (i32, i32) {
    %c0_i32 = arith.constant 0 : i32
    %c0_i32_0 = arith.constant 0 : i32
    %c0_i32_1 = arith.constant 0 : i32
    return %c0_i32, %c0_i32_0 : i32, i32
  }
  func.func @transform_5(%arg0: i32) -> (i32, i32) {
    %c0_i32 = arith.constant 0 : i32
    %c0_i32_0 = arith.constant 0 : i32
    %c0_i32_1 = arith.constant 0 : i32
    return %c0_i32, %c0_i32_0 : i32, i32
  }
  func.func @transform_6(%arg0: i32) -> (i32, i32) {
    %c0_i32 = arith.constant 0 : i32
    %c0_i32_0 = arith.constant 0 : i32
    %c0_i32_1 = arith.constant 0 : i32
    return %c0_i32, %c0_i32_0 : i32, i32
  }
  func.func @transform_7(%arg0: i32) -> (i32, i32) {
    %c0_i32 = arith.constant 0 : i32
    %c0_i32_0 = arith.constant 0 : i32
    return %arg0, %c0_i32 : i32, i32
  }
  func.func @transform_8(%arg0: i32) -> (i32, i32) {
    %c0_i32 = arith.constant 0 : i32
    %c0_i32_0 = arith.constant 0 : i32
    return %arg0, %c0_i32 : i32, i32
  }
}

</mosaic_0001>

<llo_original>
// kernel: reverse
$region0: #{reverse}
  %s0 = inlined_call_operand.vmem [shape: f32[1,256], index: 0, kind: input, shape index: {}]
  %s1 = inlined_call_operand.vmem [shape: f32[1,256], index: 1, kind: output, shape index: {}]
  %v2 = vlaneseq
  %v3 = vsub.s32 127, %v2
  %4 = vset.pattern.permute.xlu0 %v3
  $region1: #{reverse} parent=0
    #allocation0 [shape = 'u8[4096]{0}', space=vmem, size = 0x1000, scoped, tag = 'operand span for operand 0']
    #allocation1 [shape = 'u8[1024]{0}', space=vmem, size = 0x400, scoped, tag = 'packed  for operand 0']
    #allocation2 [shape = 'u8[4096]{0}', space=vmem, size = 0x1000, scoped, tag = 'operand span for operand 1']
    #allocation3 [shape = 'u8[1024]{0}', space=vmem, size = 0x400, scoped, tag = 'packed  for operand 1']
    loop: start=0, step=1, limit=4
    $region2: #{reverse} parent=1 // loop_pre_header
      _
    $region3: #{reverse} parent=1 // loop_header
      %s6 = sphi 0, %s10
      %p7 = scmp.ge.s32.totalorder %s6, 4
      %s13 = sphi 0, %s25
      %s14 = sphi 0, %s21
      %s15 = sphi 0, %s13
      %s16 = sphi 0, %s14
      %s17 = sphi 0, %s15
      %s18 = sphi 0, %s16
    $region4: #{reverse} parent=1 // loop_header_branch
      %9 = sbr.rel (%p7) target = $region8
    $region5: #{reverse} parent=1 // loop_body
      %s11 = ssub.s32 %s6, 1
      %s12 = ssub.s32 %s6, 2
      %s19 = sadd.s32 1, %s14
      %p20 = scmp.ge.s32.totalorder %s19, 2
      %s21 = scalar_select %p20, 0, %s19
      %s22 = sadd.s32 1, %s13
      %s23 = scalar_select %p20, %s22, %s13
      %p24 = scmp.ge.s32.totalorder %s23, 1
      %s25 = scalar_select %p24, 0, %s23
      %p26 = scmp.le.s32.totalorder 1, %s6
      %p27 = scmp.lt.s32.totalorder %s6, 3
      %p28 = pnand %p26, %p27
      %p29 = pneg %p28
      // Predicated region
      $region9: #{reverse} parent=5 // pred_check
        _
      $region10: #{reverse} parent=5 // pred_check_branch
        %31 = sbr.rel (%p28) target = $region12
      $region11: #{reverse} parent=5 // pred_region
        %s32 = ssub.s32 %s6, 1
      $region12: #{reverse} parent=5 // pred_fallthru
        _
      %p33 = scmp.lt.s32.totalorder %s6, 2
      // Predicated region
      $region13: #{reverse} parent=5 // pred_check
        %p34 = pneg %p33
      $region14: #{reverse} parent=5 // pred_check_branch
        %36 = sbr.rel (%p34) target = $region16
      $region15: #{reverse} parent=5 // pred_region
        %s37 = sand.u32 %s6, 1
        %s38 = sand.u32 %s6, 1
        %s39 = scalar_lea.vmem [#allocation1], %s38
        %s40 = ssub.s32 1, %s14
        %s41 = smul.addr %s13, 2
        %s42 = sadd.s32 %s40, %s41
        %s43 = scalar_lea.vmem %s0, %s42
        // Predicated region
        $region17: #{reverse} parent=15 // pred_check
          _
        $region18: #{reverse} parent=15 // pred_check_branch
          %45 = sbr.rel (0) target = $region20
        $region19: #{reverse} parent=15 // pred_region
          // Predicated region
          $region21: #{reverse} parent=19 // pred_check
            _
          $region22: #{reverse} parent=19 // pred_check_branch
            %47 = sbr.rel target = $region24
          $region23: #{reverse} parent=19 // pred_region
            // Predicated region
            $region36: #{reverse} parent=23 // pred_check
              _
            $region37: #{reverse} parent=23 // pred_check_branch
              %63 = sbr.rel (0) target = $region39
            $region38: #{reverse} parent=23 // pred_region
              %s65 = ssub.s32 2, 1
              loop: start=0, step=1, limit=1
              $region40: #{reverse} parent=38 // loop_pre_header
                _
              $region41: #{reverse} parent=38 // loop_header
                %s67 = sphi 0, %s71
                %p68 = scmp.ge.s32.totalorder %s67, 1
                %s72 = sphi %s43, %s43
                %s73 = sphi %s39, %s39
              $region42: #{reverse} parent=38 // loop_header_branch
                %70 = sbr.rel (%p68) target = $region46
              $region43: #{reverse} parent=38 // loop_body
                %v74 = vld [vmem:[%s72] sm:%s65]
                %75 = vst [vmem:[%s73] sm:%s65] %v74
              $region44: #{reverse} parent=38 // loop_footer
                %s71 = sadd.s32 1, %s67
              $region45: #{reverse} parent=38 // loop_footer_branch
                %66 = sbr.rel target = $region41
              $region46: #{reverse} parent=38 // loop_exit
                _
            $region39: #{reverse} parent=23 // pred_fallthru
              _
          $region24: #{reverse} parent=19 // pred_fallthru
            _
          // Predicated region
          $region25: #{reverse} parent=19 // pred_check
            _
          $region26: #{reverse} parent=19 // pred_check_branch
            %49 = sbr.rel (0) target = $region28
          $region27: #{reverse} parent=19 // pred_region
            %s51 = ssub.s32 2, 1
            loop: start=0, step=1, limit=1
            $region29: #{reverse} parent=27 // loop_pre_header
              _
            $region30: #{reverse} parent=27 // loop_header
              %s53 = sphi 0, %s57
              %p54 = scmp.ge.s32.totalorder %s53, 1
              %s58 = sphi %s43, %s43
              %s59 = sphi %s39, %s39
            $region31: #{reverse} parent=27 // loop_header_branch
              %56 = sbr.rel (%p54) target = $region35
            $region32: #{reverse} parent=27 // loop_body
              %v60 = vld [vmem:[%s58] sm:%s51]
              %61 = vst [vmem:[%s59] sm:%s51] %v60
            $region33: #{reverse} parent=27 // loop_footer
              %s57 = sadd.s32 1, %s53
            $region34: #{reverse} parent=27 // loop_footer_branch
              %52 = sbr.rel target = $region30
            $region35: #{reverse} parent=27 // loop_exit
              _
          $region28: #{reverse} parent=19 // pred_fallthru
            _
        $region20: #{reverse} parent=15 // pred_fallthru
          _
        %76 = vnop
      $region16: #{reverse} parent=5 // pred_fallthru
        _
      %p77 = scmp.le.s32.totalorder 1, %s6
      %p78 = scmp.lt.s32.totalorder %s6, 3
      %p79 = pnand %p77, %p78
      %p80 = pneg %p79
      // Predicated region
      $region47: #{reverse} parent=5 // pred_check
        _
      $region48: #{reverse} parent=5 // pred_check_branch
        %82 = sbr.rel (%p79) target = $region50
      $region49: #{reverse} parent=5 // pred_region
        %s83 = ssub.s32 %s6, 1
        %s84 = sand.u32 %s11, 1
        %s85 = sand.u32 %s11, 1
        %s86 = scalar_lea.vmem [#allocation1], %s85
        %s87 = sand.u32 %s11, 1
        %s88 = sand.u32 %s11, 1
        %s89 = scalar_lea.vmem [#allocation1], %s88
        %s90 = sand.u32 %s11, 1
        %s91 = sand.u32 %s11, 1
        %s92 = scalar_lea.vmem [#allocation3], %s91
        %s94 = sshll.u32 1, 1
        %s95 = ssub.s32 %s94, 1
        %v96 = vld [vmem:[%s89] sm:%s95]
        %97 = vst [vmem:[#allocation0] sm:%s95] %v96
        %s98 = ssub.s32 1, %s16
        %v99 = vld [vmem:[#allocation0] sm:$0xff]
        %100 = vperm.xlu0 %4, %v99
        %v101 = vpop.permute.xlu0 %100
        %102 = vst [vmem:[#allocation2] sm:$0xff] %v101
        %s104 = sshll.u32 1, 1
        %s105 = ssub.s32 %s104, 1
        %v107 = vld [vmem:[#allocation2] sm:%s105]
        %s108 = sshll.u32 1, 1
        %s109 = ssub.s32 %s108, 1
        %110 = vst [vmem:[%s92] sm:%s109] %v107
        %s111 = sand.u32 %s11, 1
        %s112 = sand.u32 %s11, 1
        %s113 = scalar_lea.vmem [#allocation3], %s112
        %s114 = smul.addr %s15, 2
        %s115 = sadd.s32 %s16, %s114
        %s116 = scalar_lea.vmem %s1, %s115
        // Predicated region
        $region51: #{reverse} parent=49 // pred_check
          _
        $region52: #{reverse} parent=49 // pred_check_branch
          %118 = sbr.rel (0) target = $region54
        $region53: #{reverse} parent=49 // pred_region
          // Predicated region
          $region55: #{reverse} parent=53 // pred_check
            _
          $region56: #{reverse} parent=53 // pred_check_branch
            %120 = sbr.rel target = $region58
          $region57: #{reverse} parent=53 // pred_region
            // Predicated region
            $region70: #{reverse} parent=57 // pred_check
              _
            $region71: #{reverse} parent=57 // pred_check_branch
              %136 = sbr.rel (0) target = $region73
            $region72: #{reverse} parent=57 // pred_region
              %s138 = ssub.s32 2, 1
              loop: start=0, step=1, limit=1
              $region74: #{reverse} parent=72 // loop_pre_header
                _
              $region75: #{reverse} parent=72 // loop_header
                %s140 = sphi 0, %s144
                %p141 = scmp.ge.s32.totalorder %s140, 1
                %s145 = sphi %s113, %s113
                %s146 = sphi %s116, %s116
              $region76: #{reverse} parent=72 // loop_header_branch
                %143 = sbr.rel (%p141) target = $region80
              $region77: #{reverse} parent=72 // loop_body
                %v147 = vld [vmem:[%s145] sm:%s138]
                %148 = vst [vmem:[%s146] sm:%s138] %v147
              $region78: #{reverse} parent=72 // loop_footer
                %s144 = sadd.s32 1, %s140
              $region79: #{reverse} parent=72 // loop_footer_branch
                %139 = sbr.rel target = $region75
              $region80: #{reverse} parent=72 // loop_exit
                _
            $region73: #{reverse} parent=57 // pred_fallthru
              _
          $region58: #{reverse} parent=53 // pred_fallthru
            _
          // Predicated region
          $region59: #{reverse} parent=53 // pred_check
            _
          $region60: #{reverse} parent=53 // pred_check_branch
            %122 = sbr.rel (0) target = $region62
          $region61: #{reverse} parent=53 // pred_region
            %s124 = ssub.s32 2, 1
            loop: start=0, step=1, limit=1
            $region63: #{reverse} parent=61 // loop_pre_header
              _
            $region64: #{reverse} parent=61 // loop_header
              %s126 = sphi 0, %s130
              %p127 = scmp.ge.s32.totalorder %s126, 1
              %s131 = sphi %s113, %s113
              %s132 = sphi %s116, %s116
            $region65: #{reverse} parent=61 // loop_header_branch
              %129 = sbr.rel (%p127) target = $region69
            $region66: #{reverse} parent=61 // loop_body
              %v133 = vld [vmem:[%s131] sm:%s124]
              %134 = vst [vmem:[%s132] sm:%s124] %v133
            $region67: #{reverse} parent=61 // loop_footer
              %s130 = sadd.s32 1, %s126
            $region68: #{reverse} parent=61 // loop_footer_branch
              %125 = sbr.rel target = $region64
            $region69: #{reverse} parent=61 // loop_exit
              _
          $region62: #{reverse} parent=53 // pred_fallthru
            _
        $region54: #{reverse} parent=49 // pred_fallthru
          _
        %149 = vnop
      $region50: #{reverse} parent=5 // pred_fallthru
        _
      %p150 = scmp.le.s32.totalorder 2, %s6
      // Predicated region
      $region81: #{reverse} parent=5 // pred_check
        %p151 = pneg %p150
      $region82: #{reverse} parent=5 // pred_check_branch
        %153 = sbr.rel (%p151) target = $region84
      $region83: #{reverse} parent=5 // pred_region
        %s154 = ssub.s32 %s6, 2
        %s155 = sand.u32 %s12, 1
        %s156 = sand.u32 %s12, 1
        %s157 = scalar_lea.vmem [#allocation3], %s156
      $region84: #{reverse} parent=5 // pred_fallthru
        _
    $region6: #{reverse} parent=1 // loop_footer
      %s10 = sadd.s32 1, %s6
    $region7: #{reverse} parent=1 // loop_footer_branch
      %5 = sbr.rel target = $region3
    $region8: #{reverse} parent=1 // loop_exit
      _

</llo_original>
